<compile_context>
chip_gen: v7x
topology: tpu7x:2x2x1
jax: 0.10.0
libtpu: 0.0.40
codegen_flags: <defaults>
</compile_context>

<pallas_src>
import jax
import jax.numpy as jnp
from jax import lax
from jax.experimental import pallas as pl
from jax.experimental.pallas import tpu as pltpu


def _head_kernel(x_ref, wqkv_ref, o_ref):
    # x_ref   : (bb*T, C)     bf16  (rows of the current batch block)
    # wqkv_ref: (C, 3*seg)    bf16  [q | k | v], each segment lane-tile aligned,
    #                               scale already folded into the q columns
    # o_ref   : (bb, T, H)    output dtype
    bb, T, H = o_ref.shape
    seg = wqkv_ref.shape[-1] // 3

    # Fused QKV projection over all bb*T rows in one MXU push; f32 accumulate.
    qkv = jnp.dot(x_ref[...], wqkv_ref[...],
                  preferred_element_type=jnp.float32)               # (bb*T, 3*seg)

    # Lane-tile-aligned slices (offsets 0, seg, 2*seg are multiples of 128).
    q = qkv[:, 0 * seg:0 * seg + H].reshape(bb, T, H).astype(jnp.bfloat16)
    k = qkv[:, 1 * seg:1 * seg + H].reshape(bb, T, H).astype(jnp.bfloat16)
    v = qkv[:, 2 * seg:2 * seg + H].reshape(bb, T, H).astype(jnp.bfloat16)

    # Batched scores: contract the head dim, batch over bb (no k transpose).
    scores = jnp.einsum("btd,bsd->bts", q, k,
                        preferred_element_type=jnp.float32)          # (bb, T, T)

    # Causal mask, built once per grid step and broadcast over the batch dim.
    row = lax.broadcasted_iota(jnp.int32, (T, T), 0)
    col = lax.broadcasted_iota(jnp.int32, (T, T), 1)
    neg = jnp.float32(-1e30)   # finite: no NaNs even for fully-masked rows
    scores = jnp.where((col <= row)[None, :, :], scores, neg)

    # Numerically stable softmax, all in f32; reciprocal goes to the EUP slot.
    m = jnp.max(scores, axis=-1, keepdims=True)
    e = jnp.exp(scores - m)
    denom = jnp.sum(e, axis=-1, keepdims=True)
    p = (e * pl.reciprocal(denom, approx=True)).astype(jnp.bfloat16)

    out = jnp.einsum("bts,bsd->btd", p, v,
                     preferred_element_type=jnp.float32)             # (bb, T, H)
    o_ref[...] = out.astype(o_ref.dtype)


def _round_up(n, m):
    return ((n + m - 1) // m) * m


def fuse_qkv_weights(w_key, w_query, w_value):
    """Build the lane-aligned fused QKV weight once (init-time, not per call).

    Inputs are nn.Linear-layout (H, C).  Returns a bf16 (C, 3*seg) slab with
    segments [q | k | v], each zero-padded to a 128-lane boundary, and the
    attention scale 1/sqrt(H) folded into the query columns.
    """
    H, C = w_key.shape
    seg = _round_up(H, 128)
    scale = jnp.float32(H) ** -0.5
    w = jnp.zeros((C, 3 * seg), jnp.float32)
    w = w.at[:, 0 * seg:0 * seg + H].set(w_query.T * scale)
    w = w.at[:, 1 * seg:1 * seg + H].set(w_key.T)
    w = w.at[:, 2 * seg:2 * seg + H].set(w_value.T)
    return w.astype(jnp.bfloat16)


def head_forward(x, w_qkv, head_size, *, block_b=None):
    """Causal single-head attention (eval semantics).

    x: (B, T, C);  w_qkv: fused bf16 weight from fuse_qkv_weights.
    Returns (B, T, head_size) in x.dtype.
    """
    B, T, C = x.shape
    H = head_size
    seg3 = w_qkv.shape[-1]

    if block_b is None:
        # Fold the whole batch into one grid step: best on v5e/v6e (1 TC).
        # On v7x (2 TCs/chip) pass block_b = cdiv(B, 2) so the "parallel"
        # grid axis has >= 2 steps and both TensorCores get work.
        block_b = B
    assert B % block_b == 0, "block_b must divide B"
    num_blocks = B // block_b

    # Pre-cast activations to bf16 and flatten (B, T) -> rows in the wrapper:
    # halves the HBM->VMEM DMA bytes and lets the QKV matmul run with
    # M = block_b * T instead of T.
    x_rows = x.reshape(B * T, C).astype(jnp.bfloat16)

    return pl.pallas_call(
        _head_kernel,
        out_shape=jax.ShapeDtypeStruct((B, T, H), x.dtype),
        grid_spec=pltpu.PrefetchScalarGridSpec(
            num_scalar_prefetch=0,
            grid=(num_blocks,),
            in_specs=[
                pl.BlockSpec((block_b * T, C), lambda b: (b, 0)),
                # Fused weight, resident across all grid steps.
                pl.BlockSpec((C, seg3), lambda b: (0, 0)),
            ],
            out_specs=pl.BlockSpec((block_b, T, H), lambda b: (b, 0, 0)),
        ),
        compiler_params=pltpu.CompilerParams(
            dimension_semantics=("parallel",),
        ),
    )(x_rows, w_qkv)


def head_forward_ref(x, w_key, w_query, w_value):
    """Pure-JAX f32 reference (same math as the PyTorch module in eval mode)."""
    k = jnp.einsum("btc,hc->bth", x, w_key)
    q = jnp.einsum("btc,hc->bth", x, w_query)
    v = jnp.einsum("btc,hc->bth", x, w_value)
    H = w_key.shape[0]
    T = x.shape[1]
    scores = jnp.einsum("bth,bsh->bts", q, k) * (H ** -0.5)
    mask = jnp.tril(jnp.ones((T, T), dtype=bool))
    scores = jnp.where(mask[None], scores, -jnp.inf)
    p = jax.nn.softmax(scores, axis=-1)
    return jnp.einsum("bts,bsh->bth", p, v)


if __name__ == "__main__":
    # Config: num_embed=32, head_size=16, seq_size=8, dropout=0.0 (eval mode).
    B, T, C, H = 2, 8, 32, 16

    key = jax.random.PRNGKey(0)
    kx, kk, kq, kv = jax.random.split(key, 4)

    x = jax.random.normal(kx, (B, T, C), dtype=jnp.float32)
    # Deterministic param init (nn.Linear-like scale 1/sqrt(fan_in)).
    w_key = jax.random.uniform(kk, (H, C), jnp.float32, -1.0, 1.0) * (C ** -0.5)
    w_query = jax.random.uniform(kq, (H, C), jnp.float32, -1.0, 1.0) * (C ** -0.5)
    w_value = jax.random.uniform(kv, (H, C), jnp.float32, -1.0, 1.0) * (C ** -0.5)

    # Weight fusion runs once (init-time), outside the per-call path.
    w_qkv = fuse_qkv_weights(w_key, w_query, w_value)
    w_qkv = jax.block_until_ready(w_qkv)

    out = head_forward(x, w_qkv, H)
    out = jax.block_until_ready(out)

    ref = head_forward_ref(x, w_key, w_query, w_value)
    assert out.shape == (B, T, H)
    # bf16 MXU operands + approx reciprocal => compare against the f32
    # reference with a correspondingly relaxed tolerance.
    assert jnp.allclose(out, ref, atol=2e-2, rtol=2e-2), "mismatch vs reference"

    print("KERNEL_OK")
</pallas_src>

<mosaic_0001>
module attributes {stable_mosaic.version = 11 : i64} {
  func.func @_head_kernel(%arg0: i32, %arg1: memref<16x32xbf16, #tpu.memory_space<vmem>>, %arg2: memref<32x384xbf16, #tpu.memory_space<vmem>>, %arg3: memref<2x8x16xf32, #tpu.memory_space<vmem>>) attributes {dimension_semantics = [#tpu.dimension_semantics<parallel>], iteration_bounds = array<i64: 1>, scalar_prefetch = 0 : i64, scratch_operands = 0 : i64, tpu.core_type = #tpu.core_type<tc>, window_params = [{transform_indices = @transform_0, window_bounds = array<i64: 16, 32>}, {pipeline_mode = #tpu.pipeline_mode<synchronous>, transform_indices = @transform_1, window_bounds = array<i64: 32, 384>}, {transform_indices = @transform_2, window_bounds = array<i64: 2, 8, 16>}]} {
    %c0 = arith.constant 0 : index
    %c0_0 = arith.constant 0 : index
    %0 = vector.load %arg1[%c0, %c0_0] : memref<16x32xbf16, #tpu.memory_space<vmem>>, vector<16x32xbf16>
    %c0_1 = arith.constant 0 : index
    %c0_2 = arith.constant 0 : index
    %1 = vector.load %arg2[%c0_1, %c0_2] : memref<32x384xbf16, #tpu.memory_space<vmem>>, vector<32x384xbf16>
    %cst = arith.constant dense<0.000000e+00> : vector<16x384xf32>
    %2 = tpu.matmul %0, %1, %cst {dimension_numbers = #tpu.dot_dimension_numbers<[1], [0], [0], [1], [0, 0, 1, 1], [], []>} : vector<16x32xbf16>, vector<32x384xbf16>, vector<16x384xf32> -> vector<16x384xf32>
    %3 = vector.extract_strided_slice %2 {offsets = [0, 0], sizes = [16, 16], strides = [1, 1]} : vector<16x384xf32> to vector<16x16xf32>
    %4 = vector.shape_cast %3 : vector<16x16xf32> to vector<2x8x16xf32>
    %5 = arith.truncf %4 : vector<2x8x16xf32> to vector<2x8x16xbf16>
    %6 = vector.extract_strided_slice %2 {offsets = [0, 128], sizes = [16, 16], strides = [1, 1]} : vector<16x384xf32> to vector<16x16xf32>
    %7 = vector.shape_cast %6 : vector<16x16xf32> to vector<2x8x16xf32>
    %8 = arith.truncf %7 : vector<2x8x16xf32> to vector<2x8x16xbf16>
    %9 = vector.extract_strided_slice %2 {offsets = [0, 256], sizes = [16, 16], strides = [1, 1]} : vector<16x384xf32> to vector<16x16xf32>
    %10 = vector.shape_cast %9 : vector<16x16xf32> to vector<2x8x16xf32>
    %11 = arith.truncf %10 : vector<2x8x16xf32> to vector<2x8x16xbf16>
    "tpu.trace_start"() <{level = 10 : i32, message = "btd,bsd->bts"}> : () -> ()
    %cst_3 = arith.constant dense<0.000000e+00> : vector<2x8x8xf32>
    %12 = tpu.matmul %5, %8, %cst_3 {dimension_numbers = #tpu.dot_dimension_numbers<[2], [2], [1], [1], [0, 0, 0, 1, 1, 1], [0], [0]>} : vector<2x8x16xbf16>, vector<2x8x16xbf16>, vector<2x8x8xf32> -> vector<2x8x8xf32>
    "tpu.trace_stop"() : () -> ()
    %13 = tpu.iota {dimensions = array<i32: 0>} : vector<8x8xi32>
    %14 = tpu.iota {dimensions = array<i32: 1>} : vector<8x8xi32>
    %15 = arith.cmpi sle, %14, %13 : vector<8x8xi32>
    %16 = vector.shape_cast %15 : vector<8x8xi1> to vector<1x8x8xi1>
    %cst_4 = arith.constant -1.000000e+30 : f32
    %17 = vector.shape_cast %16 : vector<1x8x8xi1> to vector<1x8x8xi1>
    %18 = vector.broadcast %17 : vector<1x8x8xi1> to vector<2x8x8xi1>
    %19 = vector.broadcast %cst_4 : f32 to vector<2x8x8xf32>
    %20 = arith.select %18, %12, %19 : vector<2x8x8xi1>, vector<2x8x8xf32>
    %cst_5 = arith.constant dense<0xFF800000> : vector<2x8xf32>
    %21 = vector.multi_reduction <maximumf>, %20, %cst_5 [2] : vector<2x8x8xf32> to vector<2x8xf32>
    %22 = vector.shape_cast %21 : vector<2x8xf32> to vector<2x8x1xf32>
    %23 = vector.broadcast %22 : vector<2x8x1xf32> to vector<2x8x8xf32>
    %24 = arith.subf %20, %23 : vector<2x8x8xf32>
    %25 = math.exp %24 : vector<2x8x8xf32>
    %cst_6 = arith.constant dense<0.000000e+00> : vector<2x8xf32>
    %26 = vector.multi_reduction <add>, %25, %cst_6 [2] : vector<2x8x8xf32> to vector<2x8xf32>
    %27 = vector.shape_cast %26 : vector<2x8xf32> to vector<2x8x1xf32>
    %28 = tpu.reciprocal %27 {approx = true} : vector<2x8x1xf32> -> vector<2x8x1xf32>
    %29 = vector.broadcast %28 : vector<2x8x1xf32> to vector<2x8x8xf32>
    %30 = arith.mulf %25, %29 : vector<2x8x8xf32>
    %31 = arith.truncf %30 : vector<2x8x8xf32> to vector<2x8x8xbf16>
    "tpu.trace_start"() <{level = 10 : i32, message = "bts,bsd->btd"}> : () -> ()
    %cst_7 = arith.constant dense<0.000000e+00> : vector<2x8x16xf32>
    %32 = tpu.matmul %31, %11, %cst_7 {dimension_numbers = #tpu.dot_dimension_numbers<[2], [1], [1], [2], [0, 0, 0, 1, 1, 2], [0], [0]>} : vector<2x8x8xbf16>, vector<2x8x16xbf16>, vector<2x8x16xf32> -> vector<2x8x16xf32>
    "tpu.trace_stop"() : () -> ()
    %c0_8 = arith.constant 0 : index
    %c0_9 = arith.constant 0 : index
    %c0_10 = arith.constant 0 : index
    %33 = vector.load %arg3[%c0_8, %c0_9, %c0_10] : memref<2x8x16xf32, #tpu.memory_space<vmem>>, vector<2x8x16xf32>
    tpu.vector_store %arg3[%c0_8, %c0_9, %c0_10], %32 {strides = array<i32>} : memref<2x8x16xf32, #tpu.memory_space<vmem>>, vector<2x8x16xf32>,
    return
  }
  func.func @transform_0(%arg0: i32) -> (i32, i32) {
    %c0_i32 = arith.constant 0 : i32
    %c0_i32_0 = arith.constant 0 : i32
    return %arg0, %c0_i32 : i32, i32
  }
  func.func @transform_1(%arg0: i32) -> (i32, i32) {
    %c0_i32 = arith.constant 0 : i32
    %c0_i32_0 = arith.constant 0 : i32
    %c0_i32_1 = arith.constant 0 : i32
    return %c0_i32, %c0_i32_0 : i32, i32
  }
  func.func @transform_2(%arg0: i32) -> (i32, i32, i32) {
    %c0_i32 = arith.constant 0 : i32
    %c0_i32_0 = arith.constant 0 : i32
    %c0_i32_1 = arith.constant 0 : i32
    return %arg0, %c0_i32, %c0_i32_0 : i32, i32, i32
  }
}

</mosaic_0001>

<llo_original>
// kernel: tpu_custom_call.1
$region0: #{tpu_custom_call.1}
  #allocation0 [shape = 'u32[]', space=smem, size = 0x4, offset = 0x4, fixed_abs, tag = 'smem constant byte address 0x4 - core index']
  #allocation1 [shape = 'u32[144,128]{1,0:T(1,128)}', space=vmem, size = 0x12000, scoped, tag = 'internal scratch']
  %s0 = inlined_call_operand.hbm [shape: bf16[16,32], index: 0, kind: input, shape index: {}]
  %s1 = inlined_call_operand.hbm [shape: bf16[32,384], index: 1, kind: input, shape index: {}]
  %s2 = inlined_call_operand.hbm [shape: f32[2,8,16], index: 2, kind: output, shape index: {}]
  %s3 = sld [smem:[#allocation0]]
  $region26: #{tpu_custom_call.1} parent=0
    _
  %s5 = ssub.s32 1, %s3
  %s6 = scalar_select 0, %s5, %s3
  $region1: #{tpu_custom_call.1} parent=0
    #allocation2 [shape = 'u8[4096]{0}', space=vmem, size = 0x1000, scoped, tag = 'input window, operand 0, single buffered']
    #allocation3 [shape = 's32[1]{0}', space=sflag, size = 0x4, scoped, tag = 'scoped memory for tpu_custom_call.1']
    #allocation4 [shape = 's32[1]{0}', space=sflag, size = 0x4, scoped, tag = 'scoped memory for tpu_custom_call.1']
    #allocation5 [shape = 'u8[24576]{0}', space=vmem, size = 0x6000, scoped, tag = 'input window, operand 1, single buffered']
    #allocation6 [shape = 's32[1]{0}', space=sflag, size = 0x4, scoped, tag = 'scoped memory for tpu_custom_call.1']
    #allocation7 [shape = 'u8[8192]{0}', space=vmem, size = 0x2000, scoped, tag = 'output window, operand 0, single buffered']
    %7 = vsyncpa [#allocation3], 0
    %8 = vsyncpa [#allocation6], 0
    %9 = vsyncpa [#allocation4], 0
    // Predicated region
    $region2: #{tpu_custom_call.1} parent=1 // pred_check
      _
    $region3: #{tpu_custom_call.1} parent=1 // pred_check_branch
      %11 = sbr.rel (0) target = $region5
    $region4: #{tpu_custom_call.1} parent=1 // pred_region
      %s13 = ssub.s32 128, 128
      %14 = vsyncadd [#allocation3], %s13
      %s15 = sshll.u32 [#allocation2], 4
      %s16 = int_to_ptr.vmem [resolvable:$true] %s15
      %21 = dma.hbm_to_vmem [thread:$0]  %s0, 128, %s16, [#allocation3], 64, 64, 4
    $region5: #{tpu_custom_call.1} parent=1 // pred_fallthru
      _
    // Predicated region
    $region6: #{tpu_custom_call.1} parent=1 // pred_check
      _
    $region7: #{tpu_custom_call.1} parent=1 // pred_check_branch
      %23 = sbr.rel (0) target = $region9
    $region8: #{tpu_custom_call.1} parent=1 // pred_region
      %s25 = ssub.s32 768, 768
      %26 = vsyncadd [#allocation6], %s25
      %s27 = sshll.u32 [#allocation5], 4
      %s28 = int_to_ptr.vmem [resolvable:$true] %s27
      %33 = dma.hbm_to_vmem [thread:$0]  %s1, 768, %s28, [#allocation6], 192, 192, 12
    $region9: #{tpu_custom_call.1} parent=1 // pred_fallthru
      _
    // Predicated region
    $region10: #{tpu_custom_call.1} parent=1 // pred_check
      _
    $region11: #{tpu_custom_call.1} parent=1 // pred_check_branch
      %35 = sbr.rel (0) target = $region13
    $region12: #{tpu_custom_call.1} parent=1 // pred_region
      %36 = dma.done [#allocation3], 128
    $region13: #{tpu_custom_call.1} parent=1 // pred_fallthru
      _
    // Predicated region
    $region14: #{tpu_custom_call.1} parent=1 // pred_check
      _
    $region15: #{tpu_custom_call.1} parent=1 // pred_check_branch
      %38 = sbr.rel (0) target = $region17
    $region16: #{tpu_custom_call.1} parent=1 // pred_region
      %39 = dma.done [#allocation6], 768
    $region17: #{tpu_custom_call.1} parent=1 // pred_fallthru
      _
    %v41 = vld [vmem:[#allocation2] sm:$0xf]
    %v42 = vld [vmem:[#allocation2 + $0x4] sm:$0xf]
    %v43 = vld [vmem:[#allocation5] sm:$0xff]
    %v44 = vld [vmem:[#allocation5 + $0x8] sm:$0xf]
    %v45 = vld [vmem:[#allocation5 + $0xc] sm:$0xff]
    %v46 = vld [vmem:[#allocation5 + $0x14] sm:$0xf]
    %v47 = vld [vmem:[#allocation5 + $0x18] sm:$0xff]
    %v48 = vld [vmem:[#allocation5 + $0x20] sm:$0xf]
    %v49 = vld [vmem:[#allocation5 + $0x24] sm:$0xff]
    %v50 = vld [vmem:[#allocation5 + $0x2c] sm:$0xf]
    %v53 = vunpack.c.l.b16 %v41
    %v54 = vunpack.c.l.b16 %v42
    %v55 = vpack.c.b16 %v54, %v53
    %v64 = vunpack.c.l.b16 %v43
    %v65 = vunpack.c.h.b16 %v43
    %v66 = vunpack.c.l.b16 %v44
    %v67 = vunpack.c.l.b16 %v45
    %v68 = vunpack.c.h.b16 %v45
    %v69 = vunpack.c.l.b16 %v46
    %v70 = vunpack.c.l.b16 %v47
    %v71 = vunpack.c.h.b16 %v47
    %v72 = vunpack.c.l.b16 %v48
    %v73 = vunpack.c.l.b16 %v49
    %v74 = vunpack.c.h.b16 %v49
    %v75 = vunpack.c.l.b16 %v50
    %v76 = vpack.c.b16 %v67, %v64
    %v77 = vpack.c.b16 %v68, %v65
    %v78 = vpack.c.b16 %v69, %v66
    %v79 = vpack.c.b16 %v73, %v70
    %v80 = vpack.c.b16 %v74, %v71
    %v81 = vpack.c.b16 %v75, %v72
    %vm88 = vcmask 261120
    %v90 = vsel %vm88, %v55, 0
    %92 = vmatprep.subr.bf16.mxu0 %v77
    %93 = vmatpush1.bf16.msra.mxu0 %v76
    %94 = vmatprep.subr.bf16.mxu0 %v80
    %95 = vmatpush1.bf16.msra.mxu0 %v79
    %96 = vmatprep.subr.bf16.mxu0 0
    %97 = vmatpush1.bf16.msra.mxu0 0
    %98 = vmatprep.subr.bf16.mxu0 0
    %99 = vmatpush1.bf16.msra.mxu0 0
    %100 = vmatprep.subr.bf16.mxu0 0
    %101 = vmatpush1.bf16.msra.mxu0 0
    %102 = vmatprep.subr.bf16.mxu0 0
    %103 = vmatpush1.bf16.msra.mxu0 0
    %104 = vmatprep.subr.bf16.mxu0 0
    %105 = vmatpush1.bf16.msra.mxu0 0
    %106 = vmatprep.subr.bf16.mxu0 0
    %107 = vmatpush1.bf16.msra.mxu0 0
    %108 = vmatprep.subr.bf16.mxu0 0
    %109 = vmatpush1.bf16.msra.mxu0 0
    %110 = vmatprep.subr.bf16.mxu0 0
    %111 = vmatpush1.bf16.msra.mxu0 0
    %112 = vmatprep.subr.bf16.mxu0 0
    %113 = vmatpush1.bf16.msra.mxu0 0
    %114 = vmatprep.subr.bf16.mxu0 0
    %115 = vmatpush1.bf16.msra.mxu0 0
    %116 = vmatprep.subr.bf16.mxu0 0
    %117 = vmatpush1.bf16.msra.mxu0 0
    %118 = vmatprep.subr.bf16.mxu0 0
    %119 = vmatpush1.bf16.msra.mxu0 0
    %120 = vmatprep.subr.bf16.mxu0 0
    %121 = vmatpush1.bf16.msra.mxu0 0
    %122 = vmatprep.subr.bf16.mxu0 0
    %123 = vmatpush1.bf16.msra.mxu0 0
    %124 = vmatprep.mubr.bf16.mxu0 0
    %125 = vmatmul.mubr.bf16.gmra.mrb[0].mxu0 %v90
    %v126 = vpop.f32.mrb[0].mxu0
    %v127 = vadd.f32 0.0, %v126
    %v128 = vpop.f32.mrb[0].mxu0
    %v129 = vadd.f32 0.0, %v128
    %v130 = vpop.f32.mrb[0].mxu0
    %v131 = vadd.f32 0.0, %v130
    %v132 = vpop.f32.mrb[0].mxu0
    %v133 = vadd.f32 0.0, %v132
    %134 = vdwg.mxu0
    %135 = vmatprep.subr.bf16.mxu0 0
    %136 = vmatpush1.bf16.msra.mxu0 %v78
    %137 = vmatprep.subr.bf16.mxu0 0
    %138 = vmatpush1.bf16.msra.mxu0 %v81
    %139 = vmatprep.subr.bf16.mxu0 0
    %140 = vmatpush1.bf16.msra.mxu0 0
    %141 = vmatprep.subr.bf16.mxu0 0
    %142 = vmatpush1.bf16.msra.mxu0 0
    %143 = vmatprep.subr.bf16.mxu0 0
    %144 = vmatpush1.bf16.msra.mxu0 0
    %145 = vmatprep.subr.bf16.mxu0 0
    %146 = vmatpush1.bf16.msra.mxu0 0
    %147 = vmatprep.subr.bf16.mxu0 0
    %148 = vmatpush1.bf16.msra.mxu0 0
    %149 = vmatprep.subr.bf16.mxu0 0
    %150 = vmatpush1.bf16.msra.mxu0 0
    %151 = vmatprep.subr.bf16.mxu0 0
    %152 = vmatpush1.bf16.msra.mxu0 0
    %153 = vmatprep.subr.bf16.mxu0 0
    %154 = vmatpush1.bf16.msra.mxu0 0
    %155 = vmatprep.subr.bf16.mxu0 0
    %156 = vmatpush1.bf16.msra.mxu0 0
    %157 = vmatprep.subr.bf16.mxu0 0
    %158 = vmatpush1.bf16.msra.mxu0 0
    %159 = vmatprep.subr.bf16.mxu0 0
    %160 = vmatpush1.bf16.msra.mxu0 0
    %161 = vmatprep.subr.bf16.mxu0 0
    %162 = vmatpush1.bf16.msra.mxu0 0
    %163 = vmatprep.subr.bf16.mxu0 0
    %164 = vmatpush1.bf16.msra.mxu0 0
    %165 = vmatprep.subr.bf16.mxu0 0
    %166 = vmatpush1.bf16.msra.mxu0 0
    %167 = vmatprep.mubr.bf16.mxu0 0
    %168 = vmatmul.mubr.bf16.gmra.mrb[0].mxu0 %v90
    %v169 = vpop.f32.mrb[0].mxu0
    %v170 = vadd.f32 0.0, %v169
    %v171 = vpop.f32.mrb[0].mxu0
    %v172 = vpop.f32.mrb[0].mxu0
    %v173 = vadd.f32 0.0, %v172
    %v174 = vpop.f32.mrb[0].mxu0
    %175 = vdwg.mxu0
    %v176 = vpack.c.bf16 %v127, %v127
    %v177 = vpack.c.bf16 %v131, %v131
    %v178 = vpack.c.bf16 %v129, %v129
    %v179 = vpack.c.bf16 %v133, %v133
    %v180 = vpack.c.bf16 %v170, %v170
    %v181 = vpack.c.bf16 %v173, %v173
    %vm182 = vcmask 130048
    %v184 = vsel %vm182, %v176, 0
    %v187 = vsel %vm182, %v178, 0
    %189 = vmatprep.subr.bf16.mxu0 0
    %190 = vmatpush1.bf16.xpose.msra.mxu0 %v187
    %191 = vmatprep.subr.bf16.mxu0 0
    %192 = vmatpush1.bf16.xpose.msra.mxu0 0
    %193 = vmatprep.subr.bf16.mxu0 0
    %194 = vmatpush1.bf16.xpose.msra.mxu0 0
    %195 = vmatprep.subr.bf16.mxu0 0
    %196 = vmatpush1.bf16.xpose.msra.mxu0 0
    %197 = vmatprep.subr.bf16.mxu0 0
    %198 = vmatpush1.bf16.xpose.msra.mxu0 0
    %199 = vmatprep.subr.bf16.mxu0 0
    %200 = vmatpush1.bf16.xpose.msra.mxu0 0
    %201 = vmatprep.subr.bf16.mxu0 0
    %202 = vmatpush1.bf16.xpose.msra.mxu0 0
    %203 = vmatprep.subr.bf16.mxu0 0
    %204 = vmatpush1.bf16.xpose.msra.mxu0 0
    %205 = vmatprep.subr.bf16.mxu0 0
    %206 = vmatpush1.bf16.xpose.msra.mxu0 0
    %207 = vmatprep.subr.bf16.mxu0 0
    %208 = vmatpush1.bf16.xpose.msra.mxu0 0
    %209 = vmatprep.subr.bf16.mxu0 0
    %210 = vmatpush1.bf16.xpose.msra.mxu0 0
    %211 = vmatprep.subr.bf16.mxu0 0
    %212 = vmatpush1.bf16.xpose.msra.mxu0 0
    %213 = vmatprep.subr.bf16.mxu0 0
    %214 = vmatpush1.bf16.xpose.msra.mxu0 0
    %215 = vmatprep.subr.bf16.mxu0 0
    %216 = vmatpush1.bf16.xpose.msra.mxu0 0
    %217 = vmatprep.subr.bf16.mxu0 0
    %218 = vmatpush1.bf16.xpose.msra.mxu0 0
    %219 = vmatprep.subr.bf16.mxu0 0
    %220 = vmatpush1.bf16.xpose.msra.mxu0 0
    %221 = vmatprep.mubr.bf16.mxu0 0
    %222 = vmatmul.mubr.bf16.gmra.mrb[0].mxu0 %v184
    %v223 = vpop.f32.mrb[0].mxu0
    %v224 = vadd.f32 0.0, %v223
    %v225 = vpop.f32.mrb[0].mxu0
    %v226 = vpop.f32.mrb[0].mxu0
    %v227 = vpop.f32.mrb[0].mxu0
    %228 = vdwg.mxu0
    %v230 = vsel %vm182, %v177, 0
    %v233 = vsel %vm182, %v179, 0
    %235 = vmatprep.subr.bf16.mxu0 0
    %236 = vmatpush1.bf16.xpose.msra.mxu0 %v233
    %237 = vmatprep.subr.bf16.mxu0 0
    %238 = vmatpush1.bf16.xpose.msra.mxu0 0
    %239 = vmatprep.subr.bf16.mxu0 0
    %240 = vmatpush1.bf16.xpose.msra.mxu0 0
    %241 = vmatprep.subr.bf16.mxu0 0
    %242 = vmatpush1.bf16.xpose.msra.mxu0 0
    %243 = vmatprep.subr.bf16.mxu0 0
    %244 = vmatpush1.bf16.xpose.msra.mxu0 0
    %245 = vmatprep.subr.bf16.mxu0 0
    %246 = vmatpush1.bf16.xpose.msra.mxu0 0
    %247 = vmatprep.subr.bf16.mxu0 0
    %248 = vmatpush1.bf16.xpose.msra.mxu0 0
    %249 = vmatprep.subr.bf16.mxu0 0
    %250 = vmatpush1.bf16.xpose.msra.mxu0 0
    %251 = vmatprep.subr.bf16.mxu0 0
    %252 = vmatpush1.bf16.xpose.msra.mxu0 0
    %253 = vmatprep.subr.bf16.mxu0 0
    %254 = vmatpush1.bf16.xpose.msra.mxu0 0
    %255 = vmatprep.subr.bf16.mxu0 0
    %256 = vmatpush1.bf16.xpose.msra.mxu0 0
    %257 = vmatprep.subr.bf16.mxu0 0
    %258 = vmatpush1.bf16.xpose.msra.mxu0 0
    %259 = vmatprep.subr.bf16.mxu0 0
    %260 = vmatpush1.bf16.xpose.msra.mxu0 0
    %261 = vmatprep.subr.bf16.mxu0 0
    %262 = vmatpush1.bf16.xpose.msra.mxu0 0
    %263 = vmatprep.subr.bf16.mxu0 0
    %264 = vmatpush1.bf16.xpose.msra.mxu0 0
    %265 = vmatprep.subr.bf16.mxu0 0
    %266 = vmatpush1.bf16.xpose.msra.mxu0 0
    %267 = vmatprep.mubr.bf16.mxu0 0
    %268 = vmatmul.mubr.bf16.gmra.mrb[0].mxu0 %v230
    %v269 = vpop.f32.mrb[0].mxu0
    %v270 = vadd.f32 0.0, %v269
    %v271 = vpop.f32.mrb[0].mxu0
    %v272 = vpop.f32.mrb[0].mxu0
    %v273 = vpop.f32.mrb[0].mxu0
    %274 = vdwg.mxu0
    %v275 = vlaneseq
    %v276 = vshrl.u32 %v275, 7
    %v277 = vlaneseq
    %v278 = vand.u32 %v277, 127
    %vm279 = vcmp.le.s32.totalorder %v278, %v276
    %v280 = vsel %vm279, 1, 0
    %vm281 = vcmp.eq.s32.totalorder %v280, 1
    %v282 = vsel %vm281, %v224, -1e+30
    %v283 = vsel %vm281, %v270, -1e+30
    %vm284 = vcmask 64512
    %v285 = vsel %vm284, %v282, -inf
    %286 = vmax.xlane.f32.xlu0 %v285
    %v287 = vpop.xlane.xlu0 %286
    %v288 = vsel %vm284, %v283, -inf
    %289 = vmax.xlane.f32.xlu0 %v288
    %v290 = vpop.xlane.xlu0 %289
    %v291 = vsub.f32 %v282, %v287
    %v292 = vsub.f32 %v283, %v290
    %v293 = vmul.f32 %v291, 1.442695
    %v294 = vpow.pop %v293
    %v295 = vmul.f32 %v292, 1.442695
    %v296 = vpow.pop %v295
    %v297 = vsel %vm284, %v294, 0.0
    %298 = vadd.xlane.f32.xlu0 %v297
    %v299 = vpop.xlane.xlu0 %298
    %v300 = vsel %vm284, %v296, 0.0
    %301 = vadd.xlane.f32.xlu0 %v300
    %v302 = vpop.xlane.xlu0 %301
    %v303 = vrcp.pop %v299
    %v304 = vrcp.pop %v302
    %v305 = vmul.f32 %v294, %v303
    %v306 = vmul.f32 %v296, %v304
    %v307 = vpack.c.bf16 %v305, %v305
    %v308 = vpack.c.bf16 %v306, %v306
    %v310 = vsel %vm284, %v307, 0
    %vm312 = vcmask 1043456
    %v314 = vsel %vm312, %v180, 0
    %316 = vmatprep.subr.bf16.mxu0 0
    %317 = vmatpush1.bf16.msra.mxu0 %v314
    %318 = vmatprep.subr.bf16.mxu0 0
    %319 = vmatpush1.bf16.msra.mxu0 0
    %320 = vmatprep.subr.bf16.mxu0 0
    %321 = vmatpush1.bf16.msra.mxu0 0
    %322 = vmatprep.subr.bf16.mxu0 0
    %323 = vmatpush1.bf16.msra.mxu0 0
    %324 = vmatprep.subr.bf16.mxu0 0
    %325 = vmatpush1.bf16.msra.mxu0 0
    %326 = vmatprep.subr.bf16.mxu0 0
    %327 = vmatpush1.bf16.msra.mxu0 0
    %328 = vmatprep.subr.bf16.mxu0 0
    %329 = vmatpush1.bf16.msra.mxu0 0
    %330 = vmatprep.subr.bf16.mxu0 0
    %331 = vmatpush1.bf16.msra.mxu0 0
    %332 = vmatprep.subr.bf16.mxu0 0
    %333 = vmatpush1.bf16.msra.mxu0 0
    %334 = vmatprep.subr.bf16.mxu0 0
    %335 = vmatpush1.bf16.msra.mxu0 0
    %336 = vmatprep.subr.bf16.mxu0 0
    %337 = vmatpush1.bf16.msra.mxu0 0
    %338 = vmatprep.subr.bf16.mxu0 0
    %339 = vmatpush1.bf16.msra.mxu0 0
    %340 = vmatprep.subr.bf16.mxu0 0
    %341 = vmatpush1.bf16.msra.mxu0 0
    %342 = vmatprep.subr.bf16.mxu0 0
    %343 = vmatpush1.bf16.msra.mxu0 0
    %344 = vmatprep.subr.bf16.mxu0 0
    %345 = vmatpush1.bf16.msra.mxu0 0
    %346 = vmatprep.subr.bf16.mxu0 0
    %347 = vmatpush1.bf16.msra.mxu0 0
    %348 = vmatprep.mubr.bf16.mxu0 0
    %349 = vmatmul.mubr.bf16.gmra.mrb[0].mxu0 %v310
    %v350 = vpop.f32.mrb[0].mxu0
    %v351 = vadd.f32 0.0, %v350
    %v352 = vpop.f32.mrb[0].mxu0
    %v353 = vpop.f32.mrb[0].mxu0
    %v354 = vpop.f32.mrb[0].mxu0
    %355 = vdwg.mxu0
    %v357 = vsel %vm284, %v308, 0
    %v360 = vsel %vm312, %v181, 0
    %362 = vmatprep.subr.bf16.mxu0 0
    %363 = vmatpush1.bf16.msra.mxu0 %v360
    %364 = vmatprep.subr.bf16.mxu0 0
    %365 = vmatpush1.bf16.msra.mxu0 0
    %366 = vmatprep.subr.bf16.mxu0 0
    %367 = vmatpush1.bf16.msra.mxu0 0
    %368 = vmatprep.subr.bf16.mxu0 0
    %369 = vmatpush1.bf16.msra.mxu0 0
    %370 = vmatprep.subr.bf16.mxu0 0
    %371 = vmatpush1.bf16.msra.mxu0 0
    %372 = vmatprep.subr.bf16.mxu0 0
    %373 = vmatpush1.bf16.msra.mxu0 0
    %374 = vmatprep.subr.bf16.mxu0 0
    %375 = vmatpush1.bf16.msra.mxu0 0
    %376 = vmatprep.subr.bf16.mxu0 0
    %377 = vmatpush1.bf16.msra.mxu0 0
    %378 = vmatprep.subr.bf16.mxu0 0
    %379 = vmatpush1.bf16.msra.mxu0 0
    %380 = vmatprep.subr.bf16.mxu0 0
    %381 = vmatpush1.bf16.msra.mxu0 0
    %382 = vmatprep.subr.bf16.mxu0 0
    %383 = vmatpush1.bf16.msra.mxu0 0
    %384 = vmatprep.subr.bf16.mxu0 0
    %385 = vmatpush1.bf16.msra.mxu0 0
    %386 = vmatprep.subr.bf16.mxu0 0
    %387 = vmatpush1.bf16.msra.mxu0 0
    %388 = vmatprep.subr.bf16.mxu0 0
    %389 = vmatpush1.bf16.msra.mxu0 0
    %390 = vmatprep.subr.bf16.mxu0 0
    %391 = vmatpush1.bf16.msra.mxu0 0
    %392 = vmatprep.subr.bf16.mxu0 0
    %393 = vmatpush1.bf16.msra.mxu0 0
    %394 = vmatprep.mubr.bf16.mxu0 0
    %395 = vmatmul.mubr.bf16.gmra.mrb[0].mxu0 %v357
    %v396 = vpop.f32.mrb[0].mxu0
    %v397 = vadd.f32 0.0, %v396
    %v398 = vpop.f32.mrb[0].mxu0
    %v399 = vpop.f32.mrb[0].mxu0
    %v400 = vpop.f32.mrb[0].mxu0
    %401 = vdwg.mxu0
    %402 = vst.msk [vmem:[#allocation7] sm:$0xff] %vm182, %v351
    %403 = vst.msk [vmem:[#allocation7 + $0x8] sm:$0xff] %vm182, %v397
    // Predicated region
    $region18: #{tpu_custom_call.1} parent=1 // pred_check
      _
    $region19: #{tpu_custom_call.1} parent=1 // pred_check_branch
      %405 = sbr.rel (0) target = $region21
    $region20: #{tpu_custom_call.1} parent=1 // pred_region
      %s407 = ssub.s32 256, 256
      %408 = vsyncadd [#allocation4], %s407
      %s409 = sshll.u32 [#allocation7], 4
      %s410 = int_to_ptr.vmem [resolvable:$true] %s409
      %415 = dma.vmem_to_hbm [thread:$0]  %s410, 256, %s2, [#allocation4], 128, 128, 8
    $region21: #{tpu_custom_call.1} parent=1 // pred_fallthru
      _
    // Predicated region
    $region22: #{tpu_custom_call.1} parent=1 // pred_check
      _
    $region23: #{tpu_custom_call.1} parent=1 // pred_check_branch
      %417 = sbr.rel (0) target = $region25
    $region24: #{tpu_custom_call.1} parent=1 // pred_region
      %418 = dma.done [#allocation4], 256
    $region25: #{tpu_custom_call.1} parent=1 // pred_fallthru
      _
    %419 = vsyncpa [#allocation3], 1
    %420 = vsyncpa [#allocation6], 1
    %421 = vsyncpa [#allocation4], 1

</llo_original>
